<compile_context>
chip_gen: v7x
topology: tpu7x:2x2x1
jax: 0.10.0
libtpu: 0.0.40
codegen_flags: <defaults>
</compile_context>

<pallas_src>
import functools
import numpy as np
import jax
import jax.numpy as jnp
from jax.experimental import pallas as pl
from jax.experimental.pallas import tpu as pltpu

F32 = jnp.float32
_VMEM = pl.BlockSpec(memory_space=pltpu.MemorySpace.VMEM)
_VMEM_LIMIT = 32 * 1024 * 1024  # explicit scoped-VMEM budget, safe on v5e/v6e/v7x


def _round_up(x, m):
    return ((x + m - 1) // m) * m


def _full_spec(shape):
    n = len(shape)
    return pl.BlockSpec(shape, lambda b, _n=n: (0,) * _n)


def _ln(x, g, b, eps=1e-5):
    mu = jnp.mean(x, axis=-1, keepdims=True)
    var = jnp.mean((x - mu) ** 2, axis=-1, keepdims=True)
    return (x - mu) * jax.lax.rsqrt(var + eps) * g + b


# ----------------------------- generic row-tiled kernels -----------------------------

def _linear_kernel(x_ref, w_ref, b_ref, o_ref):
    o_ref[...] = (jnp.dot(x_ref[...], w_ref[...],
                          preferred_element_type=jnp.float32) + b_ref[...])


def linear(x, w, b, tile_r=1024):
    """x:(R,In) @ w:(In,Out) + b; large row tiles so small inputs take one grid step."""
    R, In = x.shape
    Out = w.shape[1]
    T = min(_round_up(R, 8), _round_up(tile_r, 8))
    Rp = _round_up(R, T)
    xp = jnp.pad(x.astype(F32), ((0, Rp - R), (0, 0)))
    out = pl.pallas_call(
        _linear_kernel,
        out_shape=jax.ShapeDtypeStruct((Rp, Out), F32),
        grid=(Rp // T,),
        in_specs=[pl.BlockSpec((T, In), lambda i: (i, 0)),
                  pl.BlockSpec((In, Out), lambda i: (0, 0)),
                  pl.BlockSpec((1, Out), lambda i: (0, 0))],
        out_specs=pl.BlockSpec((T, Out), lambda i: (i, 0)),
        compiler_params=pltpu.CompilerParams(dimension_semantics=("parallel",)),
    )(xp, w.astype(F32), b.reshape(1, Out).astype(F32))
    return out[:R]


def _add_ln_kernel(x_ref, r_ref, g_ref, b_ref, o_ref):
    o_ref[...] = _ln(x_ref[...] + r_ref[...], g_ref[...], b_ref[...])


def add_layernorm(x, r, gamma, beta, tile_r=2048):
    """LayerNorm(x + r) over the last axis."""
    R, E = x.shape
    T = min(_round_up(R, 8), _round_up(tile_r, 8))
    Rp = _round_up(R, T)
    xp = jnp.pad(x.astype(F32), ((0, Rp - R), (0, 0)))
    rp = jnp.pad(r.astype(F32), ((0, Rp - R), (0, 0)))
    out = pl.pallas_call(
        _add_ln_kernel,
        out_shape=jax.ShapeDtypeStruct((Rp, E), F32),
        grid=(Rp // T,),
        in_specs=[pl.BlockSpec((T, E), lambda i: (i, 0)),
                  pl.BlockSpec((T, E), lambda i: (i, 0)),
                  pl.BlockSpec((1, E), lambda i: (0, 0)),
                  pl.BlockSpec((1, E), lambda i: (0, 0))],
        out_specs=pl.BlockSpec((T, E), lambda i: (i, 0)),
        compiler_params=pltpu.CompilerParams(dimension_semantics=("parallel",)),
    )(xp, rp, gamma.reshape(1, -1).astype(F32), beta.reshape(1, -1).astype(F32))
    return out[:R]


# ----------------------------- fused edge network -----------------------------

def _edge_kernel(ea_ref, hj_ref, cen_ref, w_ref, b_ref, red_ref, o_ref, *, gamma, Db):
    E = hj_ref.shape[-1]
    ea = ea_ref[...]                                   # (T, Db+1), last col = distance
    bf = ea[:, :Db]
    d = jnp.clip(ea[:, Db:Db + 1], 0.0, 10.0)          # (T, 1)
    rbf = jnp.exp(-gamma * (d - cen_ref[...]) ** 2)    # (T, K)   (GaussianRBF fused in)
    feats = jnp.concatenate([bf, rbf], axis=-1)        # (T, Db+K)
    # m[i, r*E+c] = Linear(feats)[i, r*E+c]            (lane-dense (T, E*E))
    m = jnp.dot(feats, w_ref[...], preferred_element_type=jnp.float32) + b_ref[...]
    # hj_rep[i, r*E+c] = hj[i, c]  -- lane broadcast, no MXU / no 'sel' constant
    hj = hj_ref[...]
    hj_rep = jnp.concatenate([hj] * E, axis=-1)
    # msg[i, r] = sum_c m[i, r*E+c] * hj[i, c] via constant block-diag reduce matmul
    o_ref[...] = jnp.dot(m * hj_rep, red_ref[...], preferred_element_type=jnp.float32)


def edge_messages(ea, hj, w, b, centers, gamma, E, tile_m=1024):
    M, Din1 = ea.shape                                  # Din1 = bond_dim + 1
    Db = Din1 - 1
    T = min(_round_up(M, 8), _round_up(tile_m, 8))
    Mp = _round_up(M, T)
    ea_p = jnp.pad(ea.astype(F32), ((0, Mp - M), (0, 0)))
    hj_p = jnp.pad(hj.astype(F32), ((0, Mp - M), (0, 0)))
    E2 = E * E
    red = jnp.asarray((np.arange(E2)[:, None] // E) == np.arange(E)[None, :],
                      dtype=np.float32)                 # (E*E, E)
    kern = functools.partial(_edge_kernel, gamma=float(gamma), Db=Db)
    out = pl.pallas_call(
        kern,
        out_shape=jax.ShapeDtypeStruct((Mp, E), F32),
        grid=(Mp // T,),
        in_specs=[pl.BlockSpec((T, Din1), lambda i: (i, 0)),
                  pl.BlockSpec((T, E), lambda i: (i, 0)),
                  pl.BlockSpec((1, centers.shape[0]), lambda i: (0, 0)),
                  pl.BlockSpec((Db + centers.shape[0], E2), lambda i: (0, 0)),
                  pl.BlockSpec((1, E2), lambda i: (0, 0)),
                  pl.BlockSpec((E2, E), lambda i: (0, 0))],
        out_specs=pl.BlockSpec((T, E), lambda i: (i, 0)),
        compiler_params=pltpu.CompilerParams(dimension_semantics=("parallel",)),
    )(ea_p, hj_p, centers.reshape(1, -1).astype(F32), w.astype(F32),
      b.reshape(1, E2).astype(F32), red)
    return out[:M]


# ----------------------------- fused transformer layer-stack + pooling ----------------

def _stack_kernel(*refs, H, L, has_bias):
    if has_bias:
        (x_ref, db_ref, m_ref, wqkv, bqkv, wo, bo,
         g1, be1, wf1, bf1, wf2, bf2, g2, be2, o_ref) = refs
    else:
        (x_ref, wqkv, bqkv, wo, bo,
         g1, be1, wf1, bf1, wf2, bf2, g2, be2, o_ref) = refs
        db_ref = m_ref = None

    x = x_ref[0]                                # (N, E)
    N, E = x.shape
    d = E // H
    scale = 1.0 / float(np.sqrt(d))

    if has_bias:
        bias = db_ref[0]                        # (N, N) pairwise-distance bias
        mrow = m_ref[0]                         # (1, N) key mask (1 valid / 0 pad)
        addm = (mrow - 1.0) * 1e30              # finite additive -inf

    # TODO(synk): for very large molecules (N ~ 2000) on v7x, tile the key axis with
    # an online-softmax inner loop instead of materializing the full (N, N) scores.
    for l in range(L):                          # layer stack unrolled, x stays in VMEM
        qkv = jnp.dot(x, wqkv[l], preferred_element_type=jnp.float32) + bqkv[l]  # (N,3E)
        heads = []
        for h in range(H):                      # heads = static lane slices, no transpose
            qh = qkv[:, h * d:(h + 1) * d]
            kh = qkv[:, E + h * d:E + (h + 1) * d]
            vh = qkv[:, 2 * E + h * d:2 * E + (h + 1) * d]
            sc = jax.lax.dot_general(qh, kh, (((1,), (1,)), ((), ())),
                                     preferred_element_type=jnp.float32) * scale
            if has_bias:
                sc = sc + bias
                sc = jnp.clip(sc, -10.0, 10.0)
                sc = sc + addm
            sc_max = jnp.max(sc, axis=-1, keepdims=True)
            p = jnp.exp(sc - sc_max)
            p = p / jnp.sum(p, axis=-1, keepdims=True)      # exact reciprocal
            heads.append(jnp.dot(p, vh, preferred_element_type=jnp.float32))
        # hoisted output projection: one K=E matmul instead of H K=d matmuls
        attn = jnp.dot(jnp.concatenate(heads, axis=-1), wo[l],
                       preferred_element_type=jnp.float32) + bo[l]
        x1 = _ln(x + attn, g1[l], be1[l])
        hmid = jnp.maximum(jnp.dot(x1, wf1[l],
                                   preferred_element_type=jnp.float32) + bf1[l], 0.0)
        h2 = jnp.dot(hmid, wf2[l], preferred_element_type=jnp.float32) + bf2[l]
        x = _ln(x1 + h2, g2[l], be2[l])

    # pooling epilogue fused into the same kernel (no (B,N,E) HBM round trip)
    if has_bias:
        pooled = jnp.dot(mrow, x, preferred_element_type=jnp.float32)   # (1, E)
        o_ref[0] = pooled / (jnp.sum(mrow) + 1e-8)
    else:
        o_ref[0] = jnp.mean(x, axis=0, keepdims=True)


def transformer_stack(x, layers, H, db=None, mask=None):
    """ALL layers of one encoder + mean pooling as a single pallas_call, grid=(B,)."""
    B, N, E = x.shape
    L = len(layers)
    has_bias = db is not None

    def stk(name, flat=False):
        w = jnp.stack([lp[name] for lp in layers]).astype(F32)
        return w.reshape(L, 1, -1) if flat else w

    weights = [stk('wqkv'), stk('bqkv', True), stk('wo'), stk('bo', True),
               stk('g1', True), stk('be1', True), stk('wf1'), stk('bf1', True),
               stk('wf2'), stk('bf2', True), stk('g2', True), stk('be2', True)]

    inputs = [x.astype(F32)]
    in_specs = [pl.BlockSpec((1, N, E), lambda b: (b, 0, 0))]
    if has_bias:
        inputs += [db.astype(F32), mask.reshape(B, 1, N).astype(F32)]
        in_specs += [pl.BlockSpec((1, N, N), lambda b: (b, 0, 0)),
                     pl.BlockSpec((1, 1, N), lambda b: (b, 0, 0))]
    for w in weights:
        inputs.append(w)
        in_specs.append(_full_spec(w.shape))

    kern = functools.partial(_stack_kernel, H=H, L=L, has_bias=has_bias)
    out = pl.pallas_call(
        kern,
        out_shape=jax.ShapeDtypeStruct((B, 1, E), F32),
        grid=(B,),
        in_specs=in_specs,
        out_specs=pl.BlockSpec((1, 1, E), lambda b: (b, 0, 0)),
        compiler_params=pltpu.CompilerParams(
            dimension_semantics=("parallel",),
            vmem_limit_bytes=_VMEM_LIMIT),
    )(*inputs)
    return out.reshape(B, E)


# ----------------------------- fused head: gating + cross-modal + readout -------------

def _head_kernel(*refs, n_cm):
    (g_ref, s_ref, gf_ref,
     fw1g, fw1s, fb1, fw2, fb2) = refs[:8]
    cm_refs = refs[8:8 + 12 * n_cm]
    rw1f, rw1g, rb1, rw2, rb2, o_ref = refs[8 + 12 * n_cm:]

    g = g_ref[...]                              # (B, E)
    s = s_ref[...]

    # FusionGating: gate = sigmoid(MLP([g, s]))  (concat expressed as split matmuls)
    hid = jnp.maximum(jnp.dot(g, fw1g[...], preferred_element_type=jnp.float32)
                      + jnp.dot(s, fw1s[...], preferred_element_type=jnp.float32)
                      + fb1[...], 0.0)
    z = jnp.dot(hid, fw2[...], preferred_element_type=jnp.float32) + fb2[...]
    gate = 1.0 / (1.0 + jnp.exp(-z))
    f = gate * g + (1.0 - gate) * s

    # CrossModal(f, f): seq-len-1 attention -> softmax over single key == 1,
    # so attn(q,k,v) == out_proj(v_proj(kv)).
    gg = f
    ss = f
    for i in range(n_cm):
        (wv1, bv1, wo1, bo1, g1, be1,
         wv2, bv2, wo2, bo2, g2, be2) = cm_refs[12 * i:12 * (i + 1)]
        g2s = jnp.dot(jnp.dot(ss, wv1[...], preferred_element_type=jnp.float32) + bv1[...],
                      wo1[...], preferred_element_type=jnp.float32) + bo1[...]
        gg = _ln(gg + g2s, g1[...], be1[...])
        s2g = jnp.dot(jnp.dot(gg, wv2[...], preferred_element_type=jnp.float32) + bv2[...],
                      wo2[...], preferred_element_type=jnp.float32) + bo2[...]
        ss = _ln(ss + s2g, g2[...], be2[...])
    fused = (gg + ss) * 0.5

    # Readout MLP on [fused, g_feats]
    h = jnp.maximum(jnp.dot(fused, rw1f[...], preferred_element_type=jnp.float32)
                    + jnp.dot(gf_ref[...], rw1g[...], preferred_element_type=jnp.float32)
                    + rb1[...], 0.0)
    o_ref[...] = jnp.dot(h, rw2[...], preferred_element_type=jnp.float32) + rb2[...]


def head_forward(params, g_tot, s_emb, g_feats):
    B, E = g_tot.shape
    gf_dim = g_feats.shape[1]
    fw1, fb1 = params['fg']['l1']
    fw2, fb2 = params['fg']['l2']
    rw1, rb1 = params['read']['l1']
    rw2, rb2 = params['read']['l2']
    inputs = [g_tot.astype(F32), s_emb.astype(F32), g_feats.astype(F32),
              fw1[:E], fw1[E:], fb1.reshape(1, -1), fw2, fb2.reshape(1, -1)]
    for lp in params['cm']:
        inputs += [lp['wv1'], lp['bv1'].reshape(1, -1),
                   lp['wo1'], lp['bo1'].reshape(1, -1),
                   lp['g1'].reshape(1, -1), lp['be1'].reshape(1, -1),
                   lp['wv2'], lp['bv2'].reshape(1, -1),
                   lp['wo2'], lp['bo2'].reshape(1, -1),
                   lp['g2'].reshape(1, -1), lp['be2'].reshape(1, -1)]
    inputs += [rw1[:E], rw1[E:E + gf_dim], rb1.reshape(1, -1),
               rw2, rb2.reshape(1, -1)]
    kern = functools.partial(_head_kernel, n_cm=len(params['cm']))
    out = pl.pallas_call(
        kern,
        out_shape=jax.ShapeDtypeStruct((B, 1), F32),
        in_specs=[_VMEM] * len(inputs),
        out_specs=_VMEM,
    )(*inputs)
    return out[:, 0]


# ----------------------------- model building blocks -----------------------------

def graph_encoder_multi(ge, batch_list, H):
    """Run the (shared-weight) graph encoder over several PyG-style batches at once."""
    # ---- flatten & offset all batches so proj / edge-net / layer-stack run ONCE ----
    node_counts = [int(b[0].shape[0]) for b in batch_list]
    node_off = np.concatenate([[0], np.cumsum(node_counts)])
    x_all = jnp.concatenate([b[0] for b in batch_list], axis=0)
    pos_all = jnp.concatenate([b[3] for b in batch_list], axis=0)
    ei_all = jnp.concatenate([b[1] + int(node_off[k])
                              for k, b in enumerate(batch_list)], axis=1)
    ea_all = jnp.concatenate([b[2] for b in batch_list], axis=0)
    gids, graph_counts, goff = [], [], 0
    for b in batch_list:
        bn = np.asarray(b[4])
        gids.append(bn + goff)
        nb = int(bn.max()) + 1
        graph_counts.append(nb)
        goff += nb
    gid_all = np.concatenate(gids)

    # node projection
    w, bb = ge['proj']
    h = linear(x_all, w, bb)
    E = h.shape[1]

    # edge network: RBF + linear + per-edge mat-vec fused in one kernel
    # TODO(synk): data-dependent gather/scatter (h[ei[1]], index_add) stay in JAX.
    hj = h[ei_all[1]]
    ew, eb = ge['enet_lin']
    msg = edge_messages(ea_all, hj, ew, eb, ge['rbf_centers'], ge['rbf_gamma'], E)
    agg = jnp.zeros_like(h).at[ei_all[0]].add(msg)
    gln, bln = ge['enet_norm']
    h = add_layernorm(h, agg, gln, bln)

    # TODO(synk): per-graph grouping/padding is data-dependent (torch nonzero); done on
    # host with the static batch vector (fixed-Nmax buckets would avoid retraces).
    B = goff
    idx_list = [np.where(gid_all == i)[0] for i in range(B)]
    Nmax = _round_up(max(len(ix) for ix in idx_list), 8)
    x_rows, pos_rows, mask_rows = [], [], []
    for ix in idx_list:
        n = len(ix)
        x_rows.append(jnp.pad(h[ix], ((0, Nmax - n), (0, 0))))
        pos_rows.append(jnp.pad(pos_all[ix], ((0, Nmax - n), (0, 0))))
        mask_rows.append(np.pad(np.ones(n, np.float32), (0, Nmax - n)))
    x_pad = jnp.stack(x_rows)                                   # (B, Nmax, E)
    pos_pad = jnp.stack(pos_rows)                               # (B, Nmax, 3)
    m_pad = jnp.asarray(np.stack(mask_rows), F32)               # (B, Nmax)
    diff = pos_pad[:, :, None, :] - pos_pad[:, None, :, :]
    d_pad = jnp.sqrt(jnp.sum(diff * diff, axis=-1))             # (B, Nmax, Nmax)

    # all graph transformer layers + masked-mean pooling in ONE pallas_call
    pooled = transformer_stack(x_pad, ge['layers'], H, db=d_pad, mask=m_pad)  # (B, E)

    outs, start = [], 0
    for nb in graph_counts:
        outs.append(pooled[start:start + nb])
        start += nb
    return outs


def sequence_encoder(se, toks, H):
    B, L = toks.shape
    # TODO(synk): embedding gather kept in JAX.
    x = se['tok'][toks] + se['pos'][jnp.arange(L)][None, :, :]
    # all sl post-norm TransformerEncoderLayers + mean pooling in ONE pallas_call
    return transformer_stack(x, se['layers'], H)


def multimodal_regressor(params, conf_batch, counts, scaffold_batch, toks, g_feats):
    gh = params['dims']['gh']
    sh = params['dims']['sh']
    # conformer batch + scaffold batch share weights -> encode them in a single pass
    gb, g_sc = graph_encoder_multi(params['ge'], [conf_batch, scaffold_batch], gh)
    outs, start = [], 0
    for c in counts:
        outs.append(jnp.mean(gb[start:start + c], axis=0))
        start += c
    g_conf = jnp.stack(outs)
    g_tot = g_conf + g_sc
    s_emb = sequence_encoder(params['se'], toks, sh)
    return head_forward(params, g_tot, s_emb, g_feats)


# ----------------------------- deterministic init -----------------------------

def init_linear(key, din, dout, scale=0.1):
    kw, kb = jax.random.split(key)
    return (jax.random.normal(kw, (din, dout), F32) * scale,
            jax.random.normal(kb, (dout,), F32) * scale)


def init_ln(E):
    return jnp.ones((E,), F32), jnp.zeros((E,), F32)


def init_attn_fused(key, E, scale=0.1):
    ks = jax.random.split(key, 4)
    wq, bq = init_linear(ks[0], E, E, scale)
    wk, bk = init_linear(ks[1], E, E, scale)
    wv, bv = init_linear(ks[2], E, E, scale)
    wo, bo = init_linear(ks[3], E, E, scale)
    return dict(wqkv=jnp.concatenate([wq, wk, wv], axis=1),
                bqkv=jnp.concatenate([bq, bk, bv]),
                wo=wo, bo=bo)


def init_tr_layer(key, E, hid):
    k1, k2, k3 = jax.random.split(key, 3)
    lp = init_attn_fused(k1, E)
    wf1, bf1 = init_linear(k2, E, hid)
    wf2, bf2 = init_linear(k3, hid, E)
    g1, be1 = init_ln(E)
    g2, be2 = init_ln(E)
    lp.update(wf1=wf1, bf1=bf1, wf2=wf2, bf2=bf2,
              g1=g1, be1=be1, g2=g2, be2=be2)
    return lp


def init_params(key, atom_dim, bond_dim, vocab_size, emb=32, gh=4, gl=2,
                sh=4, sl=2, gf_dim=3, rbf_K=32, cutoff=5.0):
    keys = iter(jax.random.split(key, 64))
    p = {'dims': dict(emb=emb, gh=gh, sh=sh)}

    ge = {}
    ge['proj'] = init_linear(next(keys), atom_dim, emb)
    centers = jnp.linspace(0.0, cutoff, rbf_K).astype(F32)
    ge['rbf_centers'] = centers
    ge['rbf_gamma'] = float(centers[1] - centers[0]) ** (-2)
    edge_in = bond_dim + rbf_K
    ge['enet_lin'] = init_linear(next(keys), edge_in, emb * emb, scale=0.02)
    ge['enet_norm'] = init_ln(emb)
    ge['layers'] = [init_tr_layer(next(keys), emb, 2 * emb) for _ in range(gl)]
    p['ge'] = ge

    se = {}
    tok = jax.random.normal(next(keys), (vocab_size, emb), F32) * 0.1
    se['tok'] = tok.at[0].set(0.0)              # padding_idx=0
    se['pos'] = jax.random.normal(next(keys), (256, emb), F32) * 0.1
    se['layers'] = [init_tr_layer(next(keys), emb, 2 * emb) for _ in range(sl)]
    p['se'] = se

    p['fg'] = dict(l1=init_linear(next(keys), 2 * emb, 64),
                   l2=init_linear(next(keys), 64, emb))

    cm = []
    for _ in range(2):
        # q/k projections do not affect seq-len-1 attention (softmax of one logit = 1),
        # so only value/out projections are materialized.
        wv1, bv1 = init_linear(next(keys), emb, emb)
        wo1, bo1 = init_linear(next(keys), emb, emb)
        wv2, bv2 = init_linear(next(keys), emb, emb)
        wo2, bo2 = init_linear(next(keys), emb, emb)
        g1, be1 = init_ln(emb)
        g2, be2 = init_ln(emb)
        cm.append(dict(wv1=wv1, bv1=bv1, wo1=wo1, bo1=bo1, g1=g1, be1=be1,
                       wv2=wv2, bv2=bv2, wo2=wo2, bo2=bo2, g2=g2, be2=be2))
    p['cm'] = cm

    p['read'] = dict(l1=init_linear(next(keys), emb + gf_dim, emb),
                     l2=init_linear(next(keys), emb, 1))
    return p


def make_graph_batch(key, node_counts, atom_dim, bond_dim):
    """Synthetic PyG-style batch: x, edge_index, edge_attr(last col=distance), pos, batch."""
    keys = jax.random.split(key, 4)
    n_total = int(sum(node_counts))
    x = jax.random.normal(keys[0], (n_total, atom_dim), F32)
    pos = jax.random.normal(keys[1], (n_total, 3), F32) * 2.0
    batch = np.concatenate([np.full(c, i, np.int32)
                            for i, c in enumerate(node_counts)])
    src, dst = [], []
    off = 0
    for c in node_counts:                       # ring graph per molecule
        for j in range(c):
            a = off + j
            nb = off + (j + 1) % c
            src += [a, nb]
            dst += [nb, a]
        off += c
    ei = jnp.asarray(np.stack([np.array(src), np.array(dst)]), jnp.int32)
    M = ei.shape[1]
    bond = jax.random.uniform(keys[2], (M, bond_dim), F32)
    dist = jax.random.uniform(keys[3], (M, 1), F32) * 4.0
    ea = jnp.concatenate([bond, dist], axis=1)
    return (x, ei, ea, pos, batch)


if __name__ == "__main__":
    key = jax.random.PRNGKey(0)
    atom_dim, bond_dim, vocab = 5, 4, 20
    emb, gh, gl, sh, sl, gf_dim = 32, 4, 2, 4, 2, 3

    kp, k1, k2, k3, k4 = jax.random.split(key, 5)
    params = init_params(kp, atom_dim, bond_dim, vocab, emb=emb, gh=gh,
                         gl=gl, sh=sh, sl=sl, gf_dim=gf_dim)

    counts = [2, 1]                                   # 2 molecules, 3 conformers total
    conf_batch = make_graph_batch(k1, [3, 4, 3], atom_dim, bond_dim)
    scaffold_batch = make_graph_batch(k2, [3, 4], atom_dim, bond_dim)
    toks = jax.random.randint(k3, (2, 8), 1, vocab).astype(jnp.int32)
    g_feats = jax.random.normal(k4, (2, gf_dim), F32)

    out = multimodal_regressor(params, conf_batch, counts, scaffold_batch,
                               toks, g_feats)
    out = jax.block_until_ready(out)
    assert out.shape == (2,) and bool(jnp.all(jnp.isfinite(out)))
    print("KERNEL_OK")
</pallas_src>

<mosaic_0001>
module attributes {stable_mosaic.version = 11 : i64} {
  func.func @_linear_kernel(%arg0: i32, %arg1: memref<24x5xf32, #tpu.memory_space<vmem>>, %arg2: memref<5x32xf32, #tpu.memory_space<vmem>>, %arg3: memref<1x32xf32, #tpu.memory_space<vmem>>, %arg4: memref<24x32xf32, #tpu.memory_space<vmem>>) attributes {dimension_semantics = [#tpu.dimension_semantics<parallel>], iteration_bounds = array<i64: 1>, scalar_prefetch = 0 : i64, scratch_operands = 0 : i64, tpu.core_type = #tpu.core_type<tc>, window_params = [{transform_indices = @transform_0, window_bounds = array<i64: 24, 5>}, {pipeline_mode = #tpu.pipeline_mode<synchronous>, transform_indices = @transform_1, window_bounds = array<i64: 5, 32>}, {pipeline_mode = #tpu.pipeline_mode<synchronous>, transform_indices = @transform_2, window_bounds = array<i64: 1, 32>}, {transform_indices = @transform_3, window_bounds = array<i64: 24, 32>}]} {
    %c0 = arith.constant 0 : index
    %c0_0 = arith.constant 0 : index
    %0 = vector.load %arg1[%c0, %c0_0] : memref<24x5xf32, #tpu.memory_space<vmem>>, vector<24x5xf32>
    %c0_1 = arith.constant 0 : index
    %c0_2 = arith.constant 0 : index
    %1 = vector.load %arg2[%c0_1, %c0_2] : memref<5x32xf32, #tpu.memory_space<vmem>>, vector<5x32xf32>
    %cst = arith.constant dense<0.000000e+00> : vector<24x32xf32>
    %2 = tpu.matmul %0, %1, %cst {dimension_numbers = #tpu.dot_dimension_numbers<[1], [0], [0], [1], [0, 0, 1, 1], [], []>} : vector<24x5xf32>, vector<5x32xf32>, vector<24x32xf32> -> vector<24x32xf32>
    %c0_3 = arith.constant 0 : index
    %c0_4 = arith.constant 0 : index
    %3 = vector.load %arg3[%c0_3, %c0_4] : memref<1x32xf32, #tpu.memory_space<vmem>>, vector<1x32xf32>
    %4 = vector.broadcast %3 : vector<1x32xf32> to vector<24x32xf32>
    %5 = arith.addf %2, %4 : vector<24x32xf32>
    %c0_5 = arith.constant 0 : index
    %c0_6 = arith.constant 0 : index
    %6 = vector.load %arg4[%c0_5, %c0_6] : memref<24x32xf32, #tpu.memory_space<vmem>>, vector<24x32xf32>
    tpu.vector_store %arg4[%c0_5, %c0_6], %5 {strides = array<i32>} : memref<24x32xf32, #tpu.memory_space<vmem>>, vector<24x32xf32>,
    return
  }
  func.func @transform_0(%arg0: i32) -> (i32, i32) {
    %c0_i32 = arith.constant 0 : i32
    %c0_i32_0 = arith.constant 0 : i32
    return %arg0, %c0_i32 : i32, i32
  }
  func.func @transform_1(%arg0: i32) -> (i32, i32) {
    %c0_i32 = arith.constant 0 : i32
    %c0_i32_0 = arith.constant 0 : i32
    %c0_i32_1 = arith.constant 0 : i32
    return %c0_i32, %c0_i32_0 : i32, i32
  }
  func.func @transform_2(%arg0: i32) -> (i32, i32) {
    %c0_i32 = arith.constant 0 : i32
    %c0_i32_0 = arith.constant 0 : i32
    %c0_i32_1 = arith.constant 0 : i32
    return %c0_i32, %c0_i32_0 : i32, i32
  }
  func.func @transform_3(%arg0: i32) -> (i32, i32) {
    %c0_i32 = arith.constant 0 : i32
    %c0_i32_0 = arith.constant 0 : i32
    return %arg0, %c0_i32 : i32, i32
  }
}

</mosaic_0001>

<llo_original>
// kernel: tpu_custom_call.1
$region0: #{tpu_custom_call.1}
  #allocation0 [shape = 'u32[]', space=smem, size = 0x4, offset = 0x4, fixed_abs, tag = 'smem constant byte address 0x4 - core index']
  #allocation1 [shape = 'u32[144,128]{1,0:T(1,128)}', space=vmem, size = 0x12000, scoped, tag = 'internal scratch']
  %s0 = inlined_call_operand.vmem [shape: f32[24,5], index: 0, kind: input, shape index: {}]
  %s1 = inlined_call_operand.vmem [shape: f32[5,32], index: 1, kind: input, shape index: {}]
  %s2 = inlined_call_operand.vmem [shape: f32[1,32], index: 2, kind: input, shape index: {}]
  %s3 = inlined_call_operand.hbm [shape: f32[24,32], index: 3, kind: output, shape index: {}]
  %s4 = sld [smem:[#allocation0]]
  $region22: #{tpu_custom_call.1} parent=0
    _
  %s6 = ssub.s32 1, %s4
  %s7 = scalar_select 0, %s6, %s4
  $region1: #{tpu_custom_call.1} parent=0
    #allocation2 [shape = 'u8[12288]{0}', space=vmem, size = 0x3000, scoped, tag = 'output window, operand 0, single buffered']
    #allocation3 [shape = 's32[1]{0}', space=sflag, size = 0x4, scoped, tag = 'scoped memory for tpu_custom_call.1']
    %8 = vsyncpa [#allocation3], 0
    // Predicated region
    $region2: #{tpu_custom_call.1} parent=1 // pred_check
      _
    $region3: #{tpu_custom_call.1} parent=1 // pred_check_branch
      %10 = sbr.rel (0) target = $region5
    $region4: #{tpu_custom_call.1} parent=1 // pred_region
      _
    $region5: #{tpu_custom_call.1} parent=1 // pred_fallthru
      _
    // Predicated region
    $region6: #{tpu_custom_call.1} parent=1 // pred_check
      _
    $region7: #{tpu_custom_call.1} parent=1 // pred_check_branch
      %12 = sbr.rel (0) target = $region9
    $region8: #{tpu_custom_call.1} parent=1 // pred_region
      _
    $region9: #{tpu_custom_call.1} parent=1 // pred_fallthru
      _
    // Predicated region
    $region10: #{tpu_custom_call.1} parent=1 // pred_check
      _
    $region11: #{tpu_custom_call.1} parent=1 // pred_check_branch
      %14 = sbr.rel (0) target = $region13
    $region12: #{tpu_custom_call.1} parent=1 // pred_region
      _
    $region13: #{tpu_custom_call.1} parent=1 // pred_fallthru
      _
    %v15 = vld [vmem:[%s0] sm:$0xff]
    %v16 = vld [vmem:[%s0 + $0x8] sm:$0xff]
    %v17 = vld [vmem:[%s0 + $0x10] sm:$0xff]
    %v18 = vld [vmem:[%s1] sm:$0x1f]
    %v19 = vld [vmem:[%s2] sm:$0x1]
    %v21 = vlaneseq
    %v22 = vshrl.u32 %v21, 7
    %v23 = vsub.s32 0, %v22
    %v24 = vrot.slane %v19, %v23
    %vm26 = vcmask 39936
    %v28 = vsel %vm26, %v15, 0
    %v31 = vsel %vm26, %v16, 0
    %v34 = vsel %vm26, %v17, 0
    %vm36 = vcmask 1044480
    %v38 = vsel %vm36, %v18, 0
    %40 = vmatprep.subr.mxu0 0.0
    %41 = vmatpush1.msra.mxu0 %v38
    %42 = vmatprep.subr.mxu0 0.0
    %43 = vmatpush1.msra.mxu0 0.0
    %44 = vmatprep.subr.mxu0 0.0
    %45 = vmatpush1.msra.mxu0 0.0
    %46 = vmatprep.subr.mxu0 0.0
    %47 = vmatpush1.msra.mxu0 0.0
    %48 = vmatprep.subr.mxu0 0.0
    %49 = vmatpush1.msra.mxu0 0.0
    %50 = vmatprep.subr.mxu0 0.0
    %51 = vmatpush1.msra.mxu0 0.0
    %52 = vmatprep.subr.mxu0 0.0
    %53 = vmatpush1.msra.mxu0 0.0
    %54 = vmatprep.subr.mxu0 0.0
    %55 = vmatpush1.msra.mxu0 0.0
    %56 = vmatprep.subr.mxu0 0.0
    %57 = vmatpush1.msra.mxu0 0.0
    %58 = vmatprep.subr.mxu0 0.0
    %59 = vmatpush1.msra.mxu0 0.0
    %60 = vmatprep.subr.mxu0 0.0
    %61 = vmatpush1.msra.mxu0 0.0
    %62 = vmatprep.subr.mxu0 0.0
    %63 = vmatpush1.msra.mxu0 0.0
    %64 = vmatprep.subr.mxu0 0.0
    %65 = vmatpush1.msra.mxu0 0.0
    %66 = vmatprep.subr.mxu0 0.0
    %67 = vmatpush1.msra.mxu0 0.0
    %68 = vmatprep.subr.mxu0 0.0
    %69 = vmatpush1.msra.mxu0 0.0
    %70 = vmatprep.subr.mxu0 0.0
    %71 = vmatpush1.msra.mxu0 0.0
    %72 = vmatprep.subr.mxu0 0.0
    %73 = vmatpush1.msra.mxu0 0.0
    %74 = vmatprep.subr.mxu0 0.0
    %75 = vmatpush1.msra.mxu0 0.0
    %76 = vmatprep.subr.mxu0 0.0
    %77 = vmatpush1.msra.mxu0 0.0
    %78 = vmatprep.subr.mxu0 0.0
    %79 = vmatpush1.msra.mxu0 0.0
    %80 = vmatprep.subr.mxu0 0.0
    %81 = vmatpush1.msra.mxu0 0.0
    %82 = vmatprep.subr.mxu0 0.0
    %83 = vmatpush1.msra.mxu0 0.0
    %84 = vmatprep.subr.mxu0 0.0
    %85 = vmatpush1.msra.mxu0 0.0
    %86 = vmatprep.subr.mxu0 0.0
    %87 = vmatpush1.msra.mxu0 0.0
    %88 = vmatprep.subr.mxu0 0.0
    %89 = vmatpush1.msra.mxu0 0.0
    %90 = vmatprep.subr.mxu0 0.0
    %91 = vmatpush1.msra.mxu0 0.0
    %92 = vmatprep.subr.mxu0 0.0
    %93 = vmatpush1.msra.mxu0 0.0
    %94 = vmatprep.subr.mxu0 0.0
    %95 = vmatpush1.msra.mxu0 0.0
    %96 = vmatprep.subr.mxu0 0.0
    %97 = vmatpush1.msra.mxu0 0.0
    %98 = vmatprep.subr.mxu0 0.0
    %99 = vmatpush1.msra.mxu0 0.0
    %100 = vmatprep.subr.mxu0 0.0
    %101 = vmatpush1.msra.mxu0 0.0
    %102 = vmatprep.subr.mxu0 0.0
    %103 = vmatpush1.msra.mxu0 0.0
    %104 = vmatprep.mubr.f32.mxu0 0.0
    %105 = vmatmul.mubr.f32.gmra.mrb[0].mxu0 %v28
    %v106 = vpop.f32.mrb[0].mxu0
    %v107 = vadd.f32 %v24, %v106
    %v108 = vpop.f32.mrb[0].mxu0
    %109 = vmatprep.mubr.f32.mxu0 0.0
    %110 = vmatmul.mubr.f32.gmra.mrb[0].mxu0 %v31
    %v111 = vpop.f32.mrb[0].mxu0
    %v112 = vadd.f32 %v24, %v111
    %v113 = vpop.f32.mrb[0].mxu0
    %114 = vmatprep.mubr.f32.mxu0 0.0
    %115 = vmatmul.mubr.f32.gmra.mrb[0].mxu0 %v34
    %v116 = vpop.f32.mrb[0].mxu0
    %v117 = vadd.f32 %v24, %v116
    %v118 = vpop.f32.mrb[0].mxu0
    %119 = vdwg.mxu0
    %vm120 = vcmask 261120
    %121 = vst.msk [vmem:[#allocation2] sm:$0xff] %vm120, %v107
    %122 = vst.msk [vmem:[#allocation2 + $0x8] sm:$0xff] %vm120, %v112
    %123 = vst.msk [vmem:[#allocation2 + $0x10] sm:$0xff] %vm120, %v117
    // Predicated region
    $region14: #{tpu_custom_call.1} parent=1 // pred_check
      _
    $region15: #{tpu_custom_call.1} parent=1 // pred_check_branch
      %125 = sbr.rel (0) target = $region17
    $region16: #{tpu_custom_call.1} parent=1 // pred_region
      %s127 = ssub.s32 384, 384
      %128 = vsyncadd [#allocation3], %s127
      %s129 = sshll.u32 [#allocation2], 4
      %s130 = int_to_ptr.vmem [resolvable:$true] %s129
      %135 = dma.vmem_to_hbm [thread:$0]  %s130, 384, %s3, [#allocation3], 128, 128, 8
    $region17: #{tpu_custom_call.1} parent=1 // pred_fallthru
      _
    // Predicated region
    $region18: #{tpu_custom_call.1} parent=1 // pred_check
      _
    $region19: #{tpu_custom_call.1} parent=1 // pred_check_branch
      %137 = sbr.rel (0) target = $region21
    $region20: #{tpu_custom_call.1} parent=1 // pred_region
      %138 = dma.done [#allocation3], 384
    $region21: #{tpu_custom_call.1} parent=1 // pred_fallthru
      _
    %139 = vsyncpa [#allocation3], 1

</llo_original>
